<compile_context>
chip_gen: v6e
topology: v6e:2x2x1
jax: 0.10.0
libtpu: 0.0.40
codegen_flags: <defaults>
</compile_context>

<pallas_src>
import functools

import jax
import jax.numpy as jnp
from jax import lax
from jax.experimental import pallas as pl
from jax.experimental.pallas import tpu as pltpu


def _round_up(x, m):
    return (x + m - 1) // m * m


# ----------------------------------------------------------------------------
# Fused kernel: full network (L linear+LIF layers) x n_steps time steps.
# Ref layout:
#   inputs : x, w_1..w_L (pre-transposed [in,out]), v_1, i_1, ..., v_L, i_L
#   outputs: z_final, v_1, i_1, ..., v_L, i_L
# ----------------------------------------------------------------------------
def _pattern_net_kernel(*refs, n_layers, n_steps, dt,
                        tau_mem_inv, tau_syn_inv, v_leak, v_th, v_reset):
    L = n_layers
    x_ref = refs[0]
    w_refs = refs[1:1 + L]
    state_refs = refs[1 + L:1 + 3 * L]          # v1, i1, v2, i2, ...
    out_refs = refs[1 + 3 * L:]                 # z_out, v1o, i1o, ...
    z_out_ref = out_refs[0]
    state_out_refs = out_refs[1:]

    x = x_ref[...]                              # [B_pad, Fin_pad]
    ws = [w[...] for w in w_refs]               # [Fin_pad, Fout_pad] each

    def lif_layer(z_in, w, v, i):
        cur = jnp.dot(z_in, w, preferred_element_type=jnp.float32)
        v_decayed = v + dt * tau_mem_inv * ((v_leak - v) + i)
        i_decayed = i + (-dt * tau_syn_inv) * i
        fired = v_decayed > v_th
        z_new = fired.astype(jnp.float32)
        v_new = jnp.where(fired, v_reset, v_decayed)   # single vselect
        i_new = i_decayed + cur
        return z_new, v_new, i_new

    def body(_, carry):
        state = list(carry[1:])
        z = x
        new_state = []
        for l in range(L):
            v, i = state[2 * l], state[2 * l + 1]
            z, v, i = lif_layer(z, ws[l], v, i)
            new_state += [v, i]
        return (z,) + tuple(new_state)

    init = (jnp.zeros(z_out_ref.shape, jnp.float32),) + tuple(
        r[...] for r in state_refs)
    result = lax.fori_loop(0, n_steps, body, init, unroll=True)

    z_out_ref[...] = result[0]
    for r, val in zip(state_out_refs, result[1:]):
        r[...] = val


def _build_fused_forward(n_steps, n_layers, b_pad, f_out_ps, dt, lif_params):
    kern = functools.partial(_pattern_net_kernel, n_layers=n_layers,
                             n_steps=n_steps, dt=dt, **lif_params)
    vmem = pl.BlockSpec(memory_space=pltpu.MemorySpace.VMEM)
    sds = jax.ShapeDtypeStruct
    out_shape = [sds((b_pad, f_out_ps[-1]), jnp.float32)]          # final z
    for fp in f_out_ps:                                            # per-layer v, i
        out_shape += [sds((b_pad, fp), jnp.float32),
                      sds((b_pad, fp), jnp.float32)]
    n_in = 1 + 3 * n_layers
    call = pl.pallas_call(
        kern,
        out_shape=tuple(out_shape),
        in_specs=[vmem] * n_in,
        out_specs=(vmem,) * len(out_shape),
    )
    return jax.jit(call)


# ----------------------------------------------------------------------------
# PatternNet wrapper: parameter prep + per-layer state bookkeeping is glue.
# Monitors / optimizer / astro hooks of the original module are host-side
# side effects with no kernel equivalent and are omitted.
# ----------------------------------------------------------------------------
class PatternNetPallas:
    LANE = 128
    SUBLANE = 8

    def __init__(self, weights, *, dt, lif_params):
        # weights: list of PyTorch-layout [out, in] matrices (U[0,1) init;
        # the torch.clip in the reference is a no-op, not applied in place).
        ws = [jnp.asarray(w, jnp.float32) for w in weights]
        self.n_layers = len(ws)
        self.f_in = ws[0].shape[1]
        self.f_outs = [w.shape[0] for w in ws]
        self.f_in_p = _round_up(self.f_in, self.LANE)
        self.f_out_ps = [_round_up(f, self.LANE) for f in self.f_outs]

        # Pre-transpose to [in, out] and zero-pad to lane-dense tiles (once).
        self.w_pads = []
        in_dim, in_dim_p = self.f_in, self.f_in_p
        for w, out_p in zip(ws, self.f_out_ps):
            out_dim = w.shape[0]
            wp = jnp.zeros((in_dim_p, out_p), jnp.float32)
            wp = wp.at[:in_dim, :out_dim].set(w.T)
            self.w_pads.append(wp)
            in_dim, in_dim_p = out_dim, out_p

        self.dt = dt
        self.lif_params = dict(lif_params)
        self._state = None          # tuple of padded (v, i) per layer
        self._b_pad = None
        self._fwd_cache = {}

    def reset_state(self):
        self._state = None

    def _get_forward(self, n_steps, b_pad):
        key = (n_steps, b_pad)
        if key not in self._fwd_cache:
            self._fwd_cache[key] = _build_fused_forward(
                n_steps, self.n_layers, b_pad, self.f_out_ps,
                self.dt, self.lif_params)
        return self._fwd_cache[key]

    def forward(self, z, n_steps=1):
        """Runs `n_steps` time steps of the whole network on input z [B, Fin].
        Equivalent to calling the PyTorch forward() n_steps times with the
        same input (state carries across calls)."""
        z = jnp.asarray(z, jnp.float32)
        B = z.shape[0]
        b_pad = _round_up(max(B, 1), self.SUBLANE)
        x_p = jnp.zeros((b_pad, self.f_in_p), jnp.float32)
        x_p = x_p.at[:B, :self.f_in].set(z)

        if self._state is None or self._b_pad != b_pad:
            # Lazy init, matching norse: v = v_leak, i = 0.
            v_leak = self.lif_params["v_leak"]
            state = []
            for fp in self.f_out_ps:
                state.append(jnp.full((b_pad, fp), v_leak, jnp.float32))
                state.append(jnp.zeros((b_pad, fp), jnp.float32))
            self._b_pad = b_pad
        else:
            state = list(self._state)

        fwd = self._get_forward(n_steps, b_pad)
        outs = fwd(x_p, *self.w_pads, *state)
        self._state = tuple(outs[1:])
        return outs[0][:B, :self.f_outs[-1]]


# ----------------------------------------------------------------------------
# Pure-JAX reference (same math, no Pallas) for correctness checks.
# ----------------------------------------------------------------------------
def reference_run(x, weights, n_steps, *, dt, p):
    states = [None] * len(weights)
    z_out = None
    for _ in range(n_steps):
        z = x
        for li, w in enumerate(weights):
            cur = z @ jnp.asarray(w, jnp.float32).T
            if states[li] is None:
                v = jnp.full(cur.shape, p["v_leak"], jnp.float32)
                i = jnp.zeros(cur.shape, jnp.float32)
            else:
                v, i = states[li]
            v_dec = v + dt * p["tau_mem_inv"] * ((p["v_leak"] - v) + i)
            i_dec = i + (-dt * p["tau_syn_inv"] * i)
            z_new = (v_dec > p["v_th"]).astype(jnp.float32)
            v_new = (1.0 - z_new) * v_dec + z_new * p["v_reset"]
            i_new = i_dec + cur
            states[li] = (v_new, i_new)
            z = z_new
        z_out = z
    return z_out


if __name__ == "__main__":
    # Synthetic config: topology input(16) -> hidden lif(32) -> output lif(8),
    # linear_params = {bias: False, init: ('uniform',)}, sim dt = 1e-3,
    # lif_params = {method: 'super', v_th: 0.3, v_reset: 0.0}.
    B, F_IN, F_HID, F_OUT = 2, 16, 32, 8
    DT = 1e-3
    LIF_PARAMS = dict(
        tau_mem_inv=100.0,   # norse LIFParameters default 1/1e-2
        tau_syn_inv=200.0,   # norse LIFParameters default 1/5e-3
        v_leak=0.0,
        v_th=0.3,
        v_reset=0.0,
    )
    N_STEPS = 4

    key = jax.random.PRNGKey(0)
    k_x, k_w1, k_w2 = jax.random.split(key, 3)
    x = jax.random.uniform(k_x, (B, F_IN), jnp.float32)          # input "spikes"
    w1 = jax.random.uniform(k_w1, (F_HID, F_IN), jnp.float32)    # nn.init.uniform_
    w2 = jax.random.uniform(k_w2, (F_OUT, F_HID), jnp.float32)   # nn.init.uniform_

    z_ref = jax.block_until_ready(
        reference_run(x, [w1, w2], N_STEPS, dt=DT, p=LIF_PARAMS))

    # (a) All N_STEPS fused into one kernel launch.
    net = PatternNetPallas([w1, w2], dt=DT, lif_params=LIF_PARAMS)
    z_fused = jax.block_until_ready(net.forward(x, n_steps=N_STEPS))

    # (b) State persistence across separate fused calls (2 + 2 steps).
    net2 = PatternNetPallas([w1, w2], dt=DT, lif_params=LIF_PARAMS)
    net2.forward(x, n_steps=2)
    z_split = jax.block_until_ready(net2.forward(x, n_steps=2))

    assert z_fused.shape == (B, F_OUT)
    assert jnp.allclose(z_fused, z_ref, atol=1e-5), (z_fused, z_ref)
    assert jnp.allclose(z_split, z_ref, atol=1e-5), (z_split, z_ref)

    print("KERNEL_OK")
</pallas_src>

<mosaic_0001>
module attributes {stable_mosaic.version = 11 : i64} {
  func.func @_pattern_net_kernel(%arg0: memref<8x128xf32, #tpu.memory_space<vmem>>, %arg1: memref<128x128xf32, #tpu.memory_space<vmem>>, %arg2: memref<128x128xf32, #tpu.memory_space<vmem>>, %arg3: memref<8x128xf32, #tpu.memory_space<vmem>>, %arg4: memref<8x128xf32, #tpu.memory_space<vmem>>, %arg5: memref<8x128xf32, #tpu.memory_space<vmem>>, %arg6: memref<8x128xf32, #tpu.memory_space<vmem>>, %arg7: memref<8x128xf32, #tpu.memory_space<vmem>>, %arg8: memref<8x128xf32, #tpu.memory_space<vmem>>, %arg9: memref<8x128xf32, #tpu.memory_space<vmem>>, %arg10: memref<8x128xf32, #tpu.memory_space<vmem>>, %arg11: memref<8x128xf32, #tpu.memory_space<vmem>>) attributes {dimension_semantics = [], scalar_prefetch = 0 : i64, scratch_operands = 0 : i64, tpu.core_type = #tpu.core_type<tc>} {
    %c0 = arith.constant 0 : index
    %c0_0 = arith.constant 0 : index
    %0 = vector.load %arg0[%c0, %c0_0] : memref<8x128xf32, #tpu.memory_space<vmem>>, vector<8x128xf32>
    %c0_1 = arith.constant 0 : index
    %c0_2 = arith.constant 0 : index
    %1 = vector.load %arg1[%c0_1, %c0_2] : memref<128x128xf32, #tpu.memory_space<vmem>>, vector<128x128xf32>
    %c0_3 = arith.constant 0 : index
    %c0_4 = arith.constant 0 : index
    %2 = vector.load %arg2[%c0_3, %c0_4] : memref<128x128xf32, #tpu.memory_space<vmem>>, vector<128x128xf32>
    %cst = arith.constant 0.000000e+00 : f32
    %3 = vector.broadcast %cst : f32 to vector<8x128xf32>
    %c0_5 = arith.constant 0 : index
    %c0_6 = arith.constant 0 : index
    %4 = vector.load %arg3[%c0_5, %c0_6] : memref<8x128xf32, #tpu.memory_space<vmem>>, vector<8x128xf32>
    %c0_7 = arith.constant 0 : index
    %c0_8 = arith.constant 0 : index
    %5 = vector.load %arg4[%c0_7, %c0_8] : memref<8x128xf32, #tpu.memory_space<vmem>>, vector<8x128xf32>
    %c0_9 = arith.constant 0 : index
    %c0_10 = arith.constant 0 : index
    %6 = vector.load %arg5[%c0_9, %c0_10] : memref<8x128xf32, #tpu.memory_space<vmem>>, vector<8x128xf32>
    %c0_11 = arith.constant 0 : index
    %c0_12 = arith.constant 0 : index
    %7 = vector.load %arg6[%c0_11, %c0_12] : memref<8x128xf32, #tpu.memory_space<vmem>>, vector<8x128xf32>
    %c0_i32 = arith.constant 0 : i32
    %cst_13 = arith.constant dense<0.000000e+00> : vector<8x128xf32>
    %8 = tpu.matmul %0, %1, %cst_13 {dimension_numbers = #tpu.dot_dimension_numbers<[1], [0], [0], [1], [0, 0, 1, 1], [], []>} : vector<8x128xf32>, vector<128x128xf32>, vector<8x128xf32> -> vector<8x128xf32>
    %cst_14 = arith.constant 0.000000e+00 : f32
    %9 = vector.broadcast %cst_14 : f32 to vector<8x128xf32>
    %10 = arith.subf %9, %4 : vector<8x128xf32>
    %11 = arith.addf %10, %5 : vector<8x128xf32>
    %cst_15 = arith.constant 1.000000e-01 : f32
    %12 = vector.broadcast %cst_15 : f32 to vector<8x128xf32>
    %13 = arith.mulf %12, %11 : vector<8x128xf32>
    %14 = arith.addf %4, %13 : vector<8x128xf32>
    %cst_16 = arith.constant -2.000000e-01 : f32
    %15 = vector.broadcast %cst_16 : f32 to vector<8x128xf32>
    %16 = arith.mulf %15, %5 : vector<8x128xf32>
    %17 = arith.addf %5, %16 : vector<8x128xf32>
    %cst_17 = arith.constant 3.000000e-01 : f32
    %18 = vector.broadcast %cst_17 : f32 to vector<8x128xf32>
    %19 = arith.cmpf ogt, %14, %18 : vector<8x128xf32>
    %20 = arith.extui %19 : vector<8x128xi1> to vector<8x128xi32>
    %21 = arith.sitofp %20 : vector<8x128xi32> to vector<8x128xf32>
    %cst_18 = arith.constant 0.000000e+00 : f32
    %22 = vector.broadcast %cst_18 : f32 to vector<8x128xf32>
    %23 = arith.select %19, %22, %14 : vector<8x128xi1>, vector<8x128xf32>
    %24 = arith.addf %17, %8 : vector<8x128xf32>
    %cst_19 = arith.constant dense<0.000000e+00> : vector<8x128xf32>
    %25 = tpu.matmul %21, %2, %cst_19 {dimension_numbers = #tpu.dot_dimension_numbers<[1], [0], [0], [1], [0, 0, 1, 1], [], []>} : vector<8x128xf32>, vector<128x128xf32>, vector<8x128xf32> -> vector<8x128xf32>
    %cst_20 = arith.constant 0.000000e+00 : f32
    %26 = vector.broadcast %cst_20 : f32 to vector<8x128xf32>
    %27 = arith.subf %26, %6 : vector<8x128xf32>
    %28 = arith.addf %27, %7 : vector<8x128xf32>
    %cst_21 = arith.constant 1.000000e-01 : f32
    %29 = vector.broadcast %cst_21 : f32 to vector<8x128xf32>
    %30 = arith.mulf %29, %28 : vector<8x128xf32>
    %31 = arith.addf %6, %30 : vector<8x128xf32>
    %cst_22 = arith.constant -2.000000e-01 : f32
    %32 = vector.broadcast %cst_22 : f32 to vector<8x128xf32>
    %33 = arith.mulf %32, %7 : vector<8x128xf32>
    %34 = arith.addf %7, %33 : vector<8x128xf32>
    %cst_23 = arith.constant 3.000000e-01 : f32
    %35 = vector.broadcast %cst_23 : f32 to vector<8x128xf32>
    %36 = arith.cmpf ogt, %31, %35 : vector<8x128xf32>
    %37 = arith.extui %36 : vector<8x128xi1> to vector<8x128xi32>
    %38 = arith.sitofp %37 : vector<8x128xi32> to vector<8x128xf32>
    %cst_24 = arith.constant 0.000000e+00 : f32
    %39 = vector.broadcast %cst_24 : f32 to vector<8x128xf32>
    %40 = arith.select %36, %39, %31 : vector<8x128xi1>, vector<8x128xf32>
    %41 = arith.addf %34, %25 : vector<8x128xf32>
    %c1_i32 = arith.constant 1 : i32
    %cst_25 = arith.constant dense<0.000000e+00> : vector<8x128xf32>
    %42 = tpu.matmul %0, %1, %cst_25 {dimension_numbers = #tpu.dot_dimension_numbers<[1], [0], [0], [1], [0, 0, 1, 1], [], []>} : vector<8x128xf32>, vector<128x128xf32>, vector<8x128xf32> -> vector<8x128xf32>
    %cst_26 = arith.constant 0.000000e+00 : f32
    %43 = vector.broadcast %cst_26 : f32 to vector<8x128xf32>
    %44 = arith.subf %43, %23 : vector<8x128xf32>
    %45 = arith.addf %44, %24 : vector<8x128xf32>
    %cst_27 = arith.constant 1.000000e-01 : f32
    %46 = vector.broadcast %cst_27 : f32 to vector<8x128xf32>
    %47 = arith.mulf %46, %45 : vector<8x128xf32>
    %48 = arith.addf %23, %47 : vector<8x128xf32>
    %cst_28 = arith.constant -2.000000e-01 : f32
    %49 = vector.broadcast %cst_28 : f32 to vector<8x128xf32>
    %50 = arith.mulf %49, %24 : vector<8x128xf32>
    %51 = arith.addf %24, %50 : vector<8x128xf32>
    %cst_29 = arith.constant 3.000000e-01 : f32
    %52 = vector.broadcast %cst_29 : f32 to vector<8x128xf32>
    %53 = arith.cmpf ogt, %48, %52 : vector<8x128xf32>
    %54 = arith.extui %53 : vector<8x128xi1> to vector<8x128xi32>
    %55 = arith.sitofp %54 : vector<8x128xi32> to vector<8x128xf32>
    %cst_30 = arith.constant 0.000000e+00 : f32
    %56 = vector.broadcast %cst_30 : f32 to vector<8x128xf32>
    %57 = arith.select %53, %56, %48 : vector<8x128xi1>, vector<8x128xf32>
    %58 = arith.addf %51, %42 : vector<8x128xf32>
    %cst_31 = arith.constant dense<0.000000e+00> : vector<8x128xf32>
    %59 = tpu.matmul %55, %2, %cst_31 {dimension_numbers = #tpu.dot_dimension_numbers<[1], [0], [0], [1], [0, 0, 1, 1], [], []>} : vector<8x128xf32>, vector<128x128xf32>, vector<8x128xf32> -> vector<8x128xf32>
    %cst_32 = arith.constant 0.000000e+00 : f32
    %60 = vector.broadcast %cst_32 : f32 to vector<8x128xf32>
    %61 = arith.subf %60, %40 : vector<8x128xf32>
    %62 = arith.addf %61, %41 : vector<8x128xf32>
    %cst_33 = arith.constant 1.000000e-01 : f32
    %63 = vector.broadcast %cst_33 : f32 to vector<8x128xf32>
    %64 = arith.mulf %63, %62 : vector<8x128xf32>
    %65 = arith.addf %40, %64 : vector<8x128xf32>
    %cst_34 = arith.constant -2.000000e-01 : f32
    %66 = vector.broadcast %cst_34 : f32 to vector<8x128xf32>
    %67 = arith.mulf %66, %41 : vector<8x128xf32>
    %68 = arith.addf %41, %67 : vector<8x128xf32>
    %cst_35 = arith.constant 3.000000e-01 : f32
    %69 = vector.broadcast %cst_35 : f32 to vector<8x128xf32>
    %70 = arith.cmpf ogt, %65, %69 : vector<8x128xf32>
    %71 = arith.extui %70 : vector<8x128xi1> to vector<8x128xi32>
    %72 = arith.sitofp %71 : vector<8x128xi32> to vector<8x128xf32>
    %cst_36 = arith.constant 0.000000e+00 : f32
    %73 = vector.broadcast %cst_36 : f32 to vector<8x128xf32>
    %74 = arith.select %70, %73, %65 : vector<8x128xi1>, vector<8x128xf32>
    %75 = arith.addf %68, %59 : vector<8x128xf32>
    %c2_i32 = arith.constant 2 : i32
    %cst_37 = arith.constant dense<0.000000e+00> : vector<8x128xf32>
    %76 = tpu.matmul %0, %1, %cst_37 {dimension_numbers = #tpu.dot_dimension_numbers<[1], [0], [0], [1], [0, 0, 1, 1], [], []>} : vector<8x128xf32>, vector<128x128xf32>, vector<8x128xf32> -> vector<8x128xf32>
    %cst_38 = arith.constant 0.000000e+00 : f32
    %77 = vector.broadcast %cst_38 : f32 to vector<8x128xf32>
    %78 = arith.subf %77, %57 : vector<8x128xf32>
    %79 = arith.addf %78, %58 : vector<8x128xf32>
    %cst_39 = arith.constant 1.000000e-01 : f32
    %80 = vector.broadcast %cst_39 : f32 to vector<8x128xf32>
    %81 = arith.mulf %80, %79 : vector<8x128xf32>
    %82 = arith.addf %57, %81 : vector<8x128xf32>
    %cst_40 = arith.constant -2.000000e-01 : f32
    %83 = vector.broadcast %cst_40 : f32 to vector<8x128xf32>
    %84 = arith.mulf %83, %58 : vector<8x128xf32>
    %85 = arith.addf %58, %84 : vector<8x128xf32>
    %cst_41 = arith.constant 3.000000e-01 : f32
    %86 = vector.broadcast %cst_41 : f32 to vector<8x128xf32>
    %87 = arith.cmpf ogt, %82, %86 : vector<8x128xf32>
    %88 = arith.extui %87 : vector<8x128xi1> to vector<8x128xi32>
    %89 = arith.sitofp %88 : vector<8x128xi32> to vector<8x128xf32>
    %cst_42 = arith.constant 0.000000e+00 : f32
    %90 = vector.broadcast %cst_42 : f32 to vector<8x128xf32>
    %91 = arith.select %87, %90, %82 : vector<8x128xi1>, vector<8x128xf32>
    %92 = arith.addf %85, %76 : vector<8x128xf32>
    %cst_43 = arith.constant dense<0.000000e+00> : vector<8x128xf32>
    %93 = tpu.matmul %89, %2, %cst_43 {dimension_numbers = #tpu.dot_dimension_numbers<[1], [0], [0], [1], [0, 0, 1, 1], [], []>} : vector<8x128xf32>, vector<128x128xf32>, vector<8x128xf32> -> vector<8x128xf32>
    %cst_44 = arith.constant 0.000000e+00 : f32
    %94 = vector.broadcast %cst_44 : f32 to vector<8x128xf32>
    %95 = arith.subf %94, %74 : vector<8x128xf32>
    %96 = arith.addf %95, %75 : vector<8x128xf32>
    %cst_45 = arith.constant 1.000000e-01 : f32
    %97 = vector.broadcast %cst_45 : f32 to vector<8x128xf32>
    %98 = arith.mulf %97, %96 : vector<8x128xf32>
    %99 = arith.addf %74, %98 : vector<8x128xf32>
    %cst_46 = arith.constant -2.000000e-01 : f32
    %100 = vector.broadcast %cst_46 : f32 to vector<8x128xf32>
    %101 = arith.mulf %100, %75 : vector<8x128xf32>
    %102 = arith.addf %75, %101 : vector<8x128xf32>
    %cst_47 = arith.constant 3.000000e-01 : f32
    %103 = vector.broadcast %cst_47 : f32 to vector<8x128xf32>
    %104 = arith.cmpf ogt, %99, %103 : vector<8x128xf32>
    %105 = arith.extui %104 : vector<8x128xi1> to vector<8x128xi32>
    %106 = arith.sitofp %105 : vector<8x128xi32> to vector<8x128xf32>
    %cst_48 = arith.constant 0.000000e+00 : f32
    %107 = vector.broadcast %cst_48 : f32 to vector<8x128xf32>
    %108 = arith.select %104, %107, %99 : vector<8x128xi1>, vector<8x128xf32>
    %109 = arith.addf %102, %93 : vector<8x128xf32>
    %c3_i32 = arith.constant 3 : i32
    %cst_49 = arith.constant dense<0.000000e+00> : vector<8x128xf32>
    %110 = tpu.matmul %0, %1, %cst_49 {dimension_numbers = #tpu.dot_dimension_numbers<[1], [0], [0], [1], [0, 0, 1, 1], [], []>} : vector<8x128xf32>, vector<128x128xf32>, vector<8x128xf32> -> vector<8x128xf32>
    %cst_50 = arith.constant 0.000000e+00 : f32
    %111 = vector.broadcast %cst_50 : f32 to vector<8x128xf32>
    %112 = arith.subf %111, %91 : vector<8x128xf32>
    %113 = arith.addf %112, %92 : vector<8x128xf32>
    %cst_51 = arith.constant 1.000000e-01 : f32
    %114 = vector.broadcast %cst_51 : f32 to vector<8x128xf32>
    %115 = arith.mulf %114, %113 : vector<8x128xf32>
    %116 = arith.addf %91, %115 : vector<8x128xf32>
    %cst_52 = arith.constant -2.000000e-01 : f32
    %117 = vector.broadcast %cst_52 : f32 to vector<8x128xf32>
    %118 = arith.mulf %117, %92 : vector<8x128xf32>
    %119 = arith.addf %92, %118 : vector<8x128xf32>
    %cst_53 = arith.constant 3.000000e-01 : f32
    %120 = vector.broadcast %cst_53 : f32 to vector<8x128xf32>
    %121 = arith.cmpf ogt, %116, %120 : vector<8x128xf32>
    %122 = arith.extui %121 : vector<8x128xi1> to vector<8x128xi32>
    %123 = arith.sitofp %122 : vector<8x128xi32> to vector<8x128xf32>
    %cst_54 = arith.constant 0.000000e+00 : f32
    %124 = vector.broadcast %cst_54 : f32 to vector<8x128xf32>
    %125 = arith.select %121, %124, %116 : vector<8x128xi1>, vector<8x128xf32>
    %126 = arith.addf %119, %110 : vector<8x128xf32>
    %cst_55 = arith.constant dense<0.000000e+00> : vector<8x128xf32>
    %127 = tpu.matmul %123, %2, %cst_55 {dimension_numbers = #tpu.dot_dimension_numbers<[1], [0], [0], [1], [0, 0, 1, 1], [], []>} : vector<8x128xf32>, vector<128x128xf32>, vector<8x128xf32> -> vector<8x128xf32>
    %cst_56 = arith.constant 0.000000e+00 : f32
    %128 = vector.broadcast %cst_56 : f32 to vector<8x128xf32>
    %129 = arith.subf %128, %108 : vector<8x128xf32>
    %130 = arith.addf %129, %109 : vector<8x128xf32>
    %cst_57 = arith.constant 1.000000e-01 : f32
    %131 = vector.broadcast %cst_57 : f32 to vector<8x128xf32>
    %132 = arith.mulf %131, %130 : vector<8x128xf32>
    %133 = arith.addf %108, %132 : vector<8x128xf32>
    %cst_58 = arith.constant -2.000000e-01 : f32
    %134 = vector.broadcast %cst_58 : f32 to vector<8x128xf32>
    %135 = arith.mulf %134, %109 : vector<8x128xf32>
    %136 = arith.addf %109, %135 : vector<8x128xf32>
    %cst_59 = arith.constant 3.000000e-01 : f32
    %137 = vector.broadcast %cst_59 : f32 to vector<8x128xf32>
    %138 = arith.cmpf ogt, %133, %137 : vector<8x128xf32>
    %139 = arith.extui %138 : vector<8x128xi1> to vector<8x128xi32>
    %140 = arith.sitofp %139 : vector<8x128xi32> to vector<8x128xf32>
    %cst_60 = arith.constant 0.000000e+00 : f32
    %141 = vector.broadcast %cst_60 : f32 to vector<8x128xf32>
    %142 = arith.select %138, %141, %133 : vector<8x128xi1>, vector<8x128xf32>
    %143 = arith.addf %136, %127 : vector<8x128xf32>
    %c0_61 = arith.constant 0 : index
    %c0_62 = arith.constant 0 : index
    %144 = vector.load %arg7[%c0_61, %c0_62] : memref<8x128xf32, #tpu.memory_space<vmem>>, vector<8x128xf32>
    tpu.vector_store %arg7[%c0_61, %c0_62], %140 {strides = array<i32>} : memref<8x128xf32, #tpu.memory_space<vmem>>, vector<8x128xf32>,
    %c0_63 = arith.constant 0 : index
    %c0_64 = arith.constant 0 : index
    %145 = vector.load %arg8[%c0_63, %c0_64] : memref<8x128xf32, #tpu.memory_space<vmem>>, vector<8x128xf32>
    tpu.vector_store %arg8[%c0_63, %c0_64], %125 {strides = array<i32>} : memref<8x128xf32, #tpu.memory_space<vmem>>, vector<8x128xf32>,
    %c0_65 = arith.constant 0 : index
    %c0_66 = arith.constant 0 : index
    %146 = vector.load %arg9[%c0_65, %c0_66] : memref<8x128xf32, #tpu.memory_space<vmem>>, vector<8x128xf32>
    tpu.vector_store %arg9[%c0_65, %c0_66], %126 {strides = array<i32>} : memref<8x128xf32, #tpu.memory_space<vmem>>, vector<8x128xf32>,
    %c0_67 = arith.constant 0 : index
    %c0_68 = arith.constant 0 : index
    %147 = vector.load %arg10[%c0_67, %c0_68] : memref<8x128xf32, #tpu.memory_space<vmem>>, vector<8x128xf32>
    tpu.vector_store %arg10[%c0_67, %c0_68], %142 {strides = array<i32>} : memref<8x128xf32, #tpu.memory_space<vmem>>, vector<8x128xf32>,
    %c0_69 = arith.constant 0 : index
    %c0_70 = arith.constant 0 : index
    %148 = vector.load %arg11[%c0_69, %c0_70] : memref<8x128xf32, #tpu.memory_space<vmem>>, vector<8x128xf32>
    tpu.vector_store %arg11[%c0_69, %c0_70], %143 {strides = array<i32>} : memref<8x128xf32, #tpu.memory_space<vmem>>, vector<8x128xf32>,
    return
  }
}

</mosaic_0001>

<llo_original>
// kernel: tpu_custom_call.1
$region0: #{tpu_custom_call.1}
  #allocation0 [shape = 'u32[]', space=smem, size = 0x4, offset = 0x4, fixed_abs, tag = 'smem constant byte address 0x4 - core index']
  #allocation1 [shape = 'u32[144,128]{1,0:T(1,128)}', space=vmem, size = 0x12000, scoped, tag = 'internal scratch']
  %s0 = inlined_call_operand.hbm [shape: f32[8,128], index: 0, kind: input, shape index: {}]
  %s1 = inlined_call_operand.hbm [shape: f32[128,128], index: 1, kind: input, shape index: {}]
  %s2 = inlined_call_operand.hbm [shape: f32[128,128], index: 2, kind: input, shape index: {}]
  %s3 = inlined_call_operand.hbm [shape: f32[8,128], index: 3, kind: input, shape index: {}]
  %s4 = inlined_call_operand.hbm [shape: f32[8,128], index: 4, kind: input, shape index: {}]
  %s5 = inlined_call_operand.vmem [shape: f32[8,128], index: 5, kind: input, shape index: {}]
  %s6 = inlined_call_operand.hbm [shape: f32[8,128], index: 6, kind: input, shape index: {}]
  %s7 = inlined_call_operand.hbm [shape: f32[8,128], index: 7, kind: output, shape index: {0}]
  %s8 = inlined_call_operand.hbm [shape: f32[8,128], index: 8, kind: output, shape index: {1}]
  %s9 = inlined_call_operand.hbm [shape: f32[8,128], index: 9, kind: output, shape index: {2}]
  %s10 = inlined_call_operand.hbm [shape: f32[8,128], index: 10, kind: output, shape index: {3}]
  %s11 = inlined_call_operand.hbm [shape: f32[8,128], index: 11, kind: output, shape index: {4}]
  %12 = xla_tuple %s7, %s8, %s9, %s10, %s11
  %s13 = sld [smem:[#allocation0]]
  $region94: #{tpu_custom_call.1} parent=0
    _
  %s15 = ssub.s32 1, %s13
  %s16 = scalar_select 0, %s15, %s13
  $region1: #{tpu_custom_call.1} parent=0
    #allocation2 [shape = 'u8[4096]{0}', space=vmem, size = 0x1000, scoped, tag = 'input window, operand 0, single buffered']
    #allocation3 [shape = 's32[1]{0}', space=sflag, size = 0x4, scoped, tag = 'scoped memory for tpu_custom_call.1']
    #allocation4 [shape = 's32[1]{0}', space=sflag, size = 0x4, scoped, tag = 'scoped memory for tpu_custom_call.1']
    #allocation5 [shape = 'u8[65536]{0}', space=vmem, size = 0x10000, scoped, tag = 'input window, operand 1, single buffered']
    #allocation6 [shape = 's32[1]{0}', space=sflag, size = 0x4, scoped, tag = 'scoped memory for tpu_custom_call.1']
    #allocation7 [shape = 'u8[65536]{0}', space=vmem, size = 0x10000, scoped, tag = 'input window, operand 2, single buffered']
    #allocation8 [shape = 'u8[4096]{0}', space=vmem, size = 0x1000, scoped, tag = 'input window, operand 3, single buffered']
    #allocation9 [shape = 's32[1]{0}', space=sflag, size = 0x4, scoped, tag = 'scoped memory for tpu_custom_call.1']
    #allocation10 [shape = 'u8[4096]{0}', space=vmem, size = 0x1000, scoped, tag = 'input window, operand 4, single buffered']
    #allocation11 [shape = 'u8[4096]{0}', space=vmem, size = 0x1000, scoped, tag = 'input window, operand 6, single buffered']
    #allocation12 [shape = 's32[1]{0}', space=sflag, size = 0x4, scoped, tag = 'scoped memory for tpu_custom_call.1']
    #allocation13 [shape = 'u8[4096]{0}', space=vmem, size = 0x1000, scoped, tag = 'output window, operand 0, single buffered']
    #allocation14 [shape = 'u8[4096]{0}', space=vmem, size = 0x1000, scoped, tag = 'output window, operand 1, single buffered']
    #allocation15 [shape = 's32[1]{0}', space=sflag, size = 0x4, scoped, tag = 'scoped memory for tpu_custom_call.1']
    #allocation16 [shape = 'u8[4096]{0}', space=vmem, size = 0x1000, scoped, tag = 'output window, operand 2, single buffered']
    #allocation17 [shape = 'u8[4096]{0}', space=vmem, size = 0x1000, scoped, tag = 'output window, operand 3, single buffered']
    #allocation18 [shape = 's32[1]{0}', space=sflag, size = 0x4, scoped, tag = 'scoped memory for tpu_custom_call.1']
    #allocation19 [shape = 'u8[4096]{0}', space=vmem, size = 0x1000, scoped, tag = 'output window, operand 4, single buffered']
    %17 = vsyncpa [#allocation3], 0
    %18 = vsyncpa [#allocation6], 0
    %19 = vsyncpa [#allocation9], 0
    %20 = vsyncpa [#allocation12], 0
    %21 = vsyncpa [#allocation4], 0
    %22 = vsyncpa [#allocation15], 0
    %23 = vsyncpa [#allocation18], 0
    // Predicated region
    $region2: #{tpu_custom_call.1} parent=1 // pred_check
      _
    $region3: #{tpu_custom_call.1} parent=1 // pred_check_branch
      %25 = sbr.rel (0) target = $region5
    $region4: #{tpu_custom_call.1} parent=1 // pred_region
      %s27 = ssub.s32 128, 128
      %28 = vsyncadd [#allocation3], %s27
      %s30 = sshll.u32 [#allocation2], 4
      %s31 = int_to_ptr.vmem [resolvable:$true] %s30
      %33 = dma.hbm_to_vmem [thread:$0]  %s0, 128, %s31, [#allocation3]
    $region5: #{tpu_custom_call.1} parent=1 // pred_fallthru
      _
    // Predicated region
    $region6: #{tpu_custom_call.1} parent=1 // pred_check
      _
    $region7: #{tpu_custom_call.1} parent=1 // pred_check_branch
      %35 = sbr.rel (0) target = $region9
    $region8: #{tpu_custom_call.1} parent=1 // pred_region
      %s37 = ssub.s32 2048, 2048
      %38 = vsyncadd [#allocation6], %s37
      %s39 = sshll.u32 [#allocation5], 4
      %s40 = int_to_ptr.vmem [resolvable:$true] %s39
      %45 = dma.hbm_to_vmem [thread:$0]  %s1, 2048, %s40, [#allocation6], 128, 128, 8
    $region9: #{tpu_custom_call.1} parent=1 // pred_fallthru
      _
    // Predicated region
    $region10: #{tpu_custom_call.1} parent=1 // pred_check
      _
    $region11: #{tpu_custom_call.1} parent=1 // pred_check_branch
      %47 = sbr.rel (0) target = $region13
    $region12: #{tpu_custom_call.1} parent=1 // pred_region
      %s49 = ssub.s32 2048, 2048
      %50 = vsyncadd [#allocation6], %s49
      %s51 = sshll.u32 [#allocation7], 4
      %s52 = int_to_ptr.vmem [resolvable:$true] %s51
      %57 = dma.hbm_to_vmem [thread:$0]  %s2, 2048, %s52, [#allocation6], 128, 128, 8
    $region13: #{tpu_custom_call.1} parent=1 // pred_fallthru
      _
    // Predicated region
    $region14: #{tpu_custom_call.1} parent=1 // pred_check
      _
    $region15: #{tpu_custom_call.1} parent=1 // pred_check_branch
      %59 = sbr.rel (0) target = $region17
    $region16: #{tpu_custom_call.1} parent=1 // pred_region
      %s61 = ssub.s32 128, 128
      %62 = vsyncadd [#allocation9], %s61
      %s64 = sshll.u32 [#allocation8], 4
      %s65 = int_to_ptr.vmem [resolvable:$true] %s64
      %67 = dma.hbm_to_vmem [thread:$0]  %s3, 128, %s65, [#allocation9]
    $region17: #{tpu_custom_call.1} parent=1 // pred_fallthru
      _
    // Predicated region
    $region18: #{tpu_custom_call.1} parent=1 // pred_check
      _
    $region19: #{tpu_custom_call.1} parent=1 // pred_check_branch
      %69 = sbr.rel (0) target = $region21
    $region20: #{tpu_custom_call.1} parent=1 // pred_region
      %s71 = ssub.s32 128, 128
      %72 = vsyncadd [#allocation9], %s71
      %s74 = sshll.u32 [#allocation10], 4
      %s75 = int_to_ptr.vmem [resolvable:$true] %s74
      %77 = dma.hbm_to_vmem [thread:$0]  %s4, 128, %s75, [#allocation9]
    $region21: #{tpu_custom_call.1} parent=1 // pred_fallthru
      _
    // Predicated region
    $region22: #{tpu_custom_call.1} parent=1 // pred_check
      _
    $region23: #{tpu_custom_call.1} parent=1 // pred_check_branch
      %79 = sbr.rel (0) target = $region25
    $region24: #{tpu_custom_call.1} parent=1 // pred_region
      _
    $region25: #{tpu_custom_call.1} parent=1 // pred_fallthru
      _
    // Predicated region
    $region26: #{tpu_custom_call.1} parent=1 // pred_check
      _
    $region27: #{tpu_custom_call.1} parent=1 // pred_check_branch
      %81 = sbr.rel (0) target = $region29
    $region28: #{tpu_custom_call.1} parent=1 // pred_region
      %s83 = ssub.s32 128, 128
      %84 = vsyncadd [#allocation12], %s83
      %s86 = sshll.u32 [#allocation11], 4
      %s87 = int_to_ptr.vmem [resolvable:$true] %s86
      %89 = dma.hbm_to_vmem [thread:$0]  %s6, 128, %s87, [#allocation12]
    $region29: #{tpu_custom_call.1} parent=1 // pred_fallthru
      _
    // Predicated region
    $region30: #{tpu_custom_call.1} parent=1 // pred_check
      _
    $region31: #{tpu_custom_call.1} parent=1 // pred_check_branch
      %91 = sbr.rel (0) target = $region33
    $region32: #{tpu_custom_call.1} parent=1 // pred_region
      %92 = dma.done [#allocation3], 128
    $region33: #{tpu_custom_call.1} parent=1 // pred_fallthru
      _
    // Predicated region
    $region34: #{tpu_custom_call.1} parent=1 // pred_check
      _
    $region35: #{tpu_custom_call.1} parent=1 // pred_check_branch
      %94 = sbr.rel (0) target = $region37
    $region36: #{tpu_custom_call.1} parent=1 // pred_region
      %95 = dma.done [#allocation6], 2048
    $region37: #{tpu_custom_call.1} parent=1 // pred_fallthru
      _
    // Predicated region
    $region38: #{tpu_custom_call.1} parent=1 // pred_check
      _
    $region39: #{tpu_custom_call.1} parent=1 // pred_check_branch
      %97 = sbr.rel (0) target = $region41
    $region40: #{tpu_custom_call.1} parent=1 // pred_region
      %98 = dma.done [#allocation6], 2048
    $region41: #{tpu_custom_call.1} parent=1 // pred_fallthru
      _
    // Predicated region
    $region42: #{tpu_custom_call.1} parent=1 // pred_check
      _
    $region43: #{tpu_custom_call.1} parent=1 // pred_check_branch
      %100 = sbr.rel (0) target = $region45
    $region44: #{tpu_custom_call.1} parent=1 // pred_region
      %101 = dma.done [#allocation9], 128
    $region45: #{tpu_custom_call.1} parent=1 // pred_fallthru
      _
    // Predicated region
    $region46: #{tpu_custom_call.1} parent=1 // pred_check
      _
    $region47: #{tpu_custom_call.1} parent=1 // pred_check_branch
      %103 = sbr.rel (0) target = $region49
    $region48: #{tpu_custom_call.1} parent=1 // pred_region
      %104 = dma.done [#allocation9], 128
    $region49: #{tpu_custom_call.1} parent=1 // pred_fallthru
      _
    // Predicated region
    $region50: #{tpu_custom_call.1} parent=1 // pred_check
      _
    $region51: #{tpu_custom_call.1} parent=1 // pred_check_branch
      %106 = sbr.rel (0) target = $region53
    $region52: #{tpu_custom_call.1} parent=1 // pred_region
      %107 = dma.done [#allocation12], 128
    $region53: #{tpu_custom_call.1} parent=1 // pred_fallthru
      _
    %v108 = vld [vmem:[#allocation2] sm:$0xff]
    %v109 = vld [vmem:[#allocation5] sm:$0xff]
    %v110 = vld [vmem:[#allocation5 + $0x8] sm:$0xff]
    %v111 = vld [vmem:[#allocation5 + $0x10] sm:$0xff]
    %v112 = vld [vmem:[#allocation5 + $0x18] sm:$0xff]
    %v113 = vld [vmem:[#allocation5 + $0x20] sm:$0xff]
    %v114 = vld [vmem:[#allocation5 + $0x28] sm:$0xff]
    %v115 = vld [vmem:[#allocation5 + $0x30] sm:$0xff]
    %v116 = vld [vmem:[#allocation5 + $0x38] sm:$0xff]
    %v117 = vld [vmem:[#allocation5 + $0x40] sm:$0xff]
    %v118 = vld [vmem:[#allocation5 + $0x48] sm:$0xff]
    %v119 = vld [vmem:[#allocation5 + $0x50] sm:$0xff]
    %v120 = vld [vmem:[#allocation5 + $0x58] sm:$0xff]
    %v121 = vld [vmem:[#allocation5 + $0x60] sm:$0xff]
    %v122 = vld [vmem:[#allocation5 + $0x68] sm:$0xff]
    %v123 = vld [vmem:[#allocation5 + $0x70] sm:$0xff]
    %v124 = vld [vmem:[#allocation5 + $0x78] sm:$0xff]
    %v125 = vld [vmem:[#allocation7] sm:$0xff]
    %v126 = vld [vmem:[#allocation7 + $0x8] sm:$0xff]
    %v127 = vld [vmem:[#allocation7 + $0x10] sm:$0xff]
    %v128 = vld [vmem:[#allocation7 + $0x18] sm:$0xff]
    %v129 = vld [vmem:[#allocation7 + $0x20] sm:$0xff]
    %v130 = vld [vmem:[#allocation7 + $0x28] sm:$0xff]
    %v131 = vld [vmem:[#allocation7 + $0x30] sm:$0xff]
    %v132 = vld [vmem:[#allocation7 + $0x38] sm:$0xff]
    %v133 = vld [vmem:[#allocation7 + $0x40] sm:$0xff]
    %v134 = vld [vmem:[#allocation7 + $0x48] sm:$0xff]
    %v135 = vld [vmem:[#allocation7 + $0x50] sm:$0xff]
    %v136 = vld [vmem:[#allocation7 + $0x58] sm:$0xff]
    %v137 = vld [vmem:[#allocation7 + $0x60] sm:$0xff]
    %v138 = vld [vmem:[#allocation7 + $0x68] sm:$0xff]
    %v139 = vld [vmem:[#allocation7 + $0x70] sm:$0xff]
    %v140 = vld [vmem:[#allocation7 + $0x78] sm:$0xff]
    %v141 = vld [vmem:[#allocation8] sm:$0xff]
    %v142 = vld [vmem:[#allocation10] sm:$0xff]
    %v143 = vld [vmem:[%s5] sm:$0xff]
    %v144 = vld [vmem:[#allocation11] sm:$0xff]
    %145 = vmatprep.subr.mxu0 0.0
    %146 = vmatpush1.msra.mxu0 %v124
    %147 = vmatprep.subr.mxu0 0.0
    %148 = vmatpush1.msra.mxu0 %v123
    %149 = vmatprep.subr.mxu0 0.0
    %150 = vmatpush1.msra.mxu0 %v122
    %151 = vmatprep.subr.mxu0 0.0
    %152 = vmatpush1.msra.mxu0 %v121
    %153 = vmatprep.subr.mxu0 0.0
    %154 = vmatpush1.msra.mxu0 %v120
    %155 = vmatprep.subr.mxu0 0.0
    %156 = vmatpush1.msra.mxu0 %v119
    %157 = vmatprep.subr.mxu0 0.0
    %158 = vmatpush1.msra.mxu0 %v118
    %159 = vmatprep.subr.mxu0 0.0
    %160 = vmatpush1.msra.mxu0 %v117
    %161 = vmatprep.subr.mxu0 0.0
    %162 = vmatpush1.msra.mxu0 %v116
    %163 = vmatprep.subr.mxu0 0.0
    %164 = vmatpush1.msra.mxu0 %v115
    %165 = vmatprep.subr.mxu0 0.0
    %166 = vmatpush1.msra.mxu0 %v114
    %167 = vmatprep.subr.mxu0 0.0
    %168 = vmatpush1.msra.mxu0 %v113
    %169 = vmatprep.subr.mxu0 0.0
    %170 = vmatpush1.msra.mxu0 %v112
    %171 = vmatprep.subr.mxu0 0.0
    %172 = vmatpush1.msra.mxu0 %v111
    %173 = vmatprep.subr.mxu0 0.0
    %174 = vmatpush1.msra.mxu0 %v110
    %175 = vmatprep.subr.mxu0 0.0
    %176 = vmatpush1.msra.mxu0 %v109
    %177 = vmatprep.subr.mxu0 0.0
    %178 = vmatpush2.msra.mxu0 0.0
    %179 = vmatprep.subr.mxu0 0.0
    %180 = vmatpush2.msra.mxu0 0.0
    %181 = vmatprep.subr.mxu0 0.0
    %182 = vmatpush2.msra.mxu0 0.0
    %183 = vmatprep.subr.mxu0 0.0
    %184 = vmatpush2.msra.mxu0 0.0
    %185 = vmatprep.subr.mxu0 0.0
    %186 = vmatpush2.msra.mxu0 0.0
    %187 = vmatprep.subr.mxu0 0.0
    %188 = vmatpush2.msra.mxu0 0.0
    %189 = vmatprep.subr.mxu0 0.0
    %190 = vmatpush2.msra.mxu0 0.0
    %191 = vmatprep.subr.mxu0 0.0
    %192 = vmatpush2.msra.mxu0 0.0
    %193 = vmatprep.subr.mxu0 0.0
    %194 = vmatpush2.msra.mxu0 0.0
    %195 = vmatprep.subr.mxu0 0.0
    %196 = vmatpush2.msra.mxu0 0.0
    %197 = vmatprep.subr.mxu0 0.0
    %198 = vmatpush2.msra.mxu0 0.0
    %199 = vmatprep.subr.mxu0 0.0
    %200 = vmatpush2.msra.mxu0 0.0
    %201 = vmatprep.subr.mxu0 0.0
    %202 = vmatpush2.msra.mxu0 0.0
    %203 = vmatprep.subr.mxu0 0.0
    %204 = vmatpush2.msra.mxu0 0.0
    %205 = vmatprep.subr.mxu0 0.0
    %206 = vmatpush2.msra.mxu0 0.0
    %207 = vmatprep.subr.mxu0 0.0
    %208 = vmatpush2.msra.mxu0 0.0
    %209 = vmatprep.mubr.f32.mxu0 0.0
    %210 = vmatmul.mubr.f32.gmra.mxu0 %v108
    %v211 = vpop.f32.mrf.mxu0
    %v212 = vadd.f32 0.0, %v211
    %v213 = vpop.f32.mrf.mxu0
    %214 = vdwg.mxu0
    %v215 = vsub.f32 0.0, %v141
    %v216 = vadd.f32 %v215, %v142
    %v217 = vmul.f32 %v216, 0.1
    %v218 = vadd.f32 %v141, %v217
    %v219 = vmul.f32 %v142, -0.2
    %v220 = vadd.f32 %v142, %v219
    %vm221 = vcmp.gt.f32.partialorder %v218, 0.3
    %v222 = vsel %vm221, 1, 0
    %v223 = vcvt.s32.f32 %v222
    %v224 = vsel %vm221, 0.0, %v218
    %v225 = vadd.f32 %v220, %v212
    %226 = vmatprep.subr.mxu0 0.0
    %227 = vmatpush1.msra.mxu0 %v140
    %228 = vmatprep.subr.mxu0 0.0
    %229 = vmatpush1.msra.mxu0 %v139
    %230 = vmatprep.subr.mxu0 0.0
    %231 = vmatpush1.msra.mxu0 %v138
    %232 = vmatprep.subr.mxu0 0.0
    %233 = vmatpush1.msra.mxu0 %v137
    %234 = vmatprep.subr.mxu0 0.0
    %235 = vmatpush1.msra.mxu0 %v136
    %236 = vmatprep.subr.mxu0 0.0
    %237 = vmatpush1.msra.mxu0 %v135
    %238 = vmatprep.subr.mxu0 0.0
    %239 = vmatpush1.msra.mxu0 %v134
    %240 = vmatprep.subr.mxu0 0.0
    %241 = vmatpush1.msra.mxu0 %v133
    %242 = vmatprep.subr.mxu0 0.0
    %243 = vmatpush1.msra.mxu0 %v132
    %244 = vmatprep.subr.mxu0 0.0
    %245 = vmatpush1.msra.mxu0 %v131
    %246 = vmatprep.subr.mxu0 0.0
    %247 = vmatpush1.msra.mxu0 %v130
    %248 = vmatprep.subr.mxu0 0.0
    %249 = vmatpush1.msra.mxu0 %v129
    %250 = vmatprep.subr.mxu0 0.0
    %251 = vmatpush1.msra.mxu0 %v128
    %252 = vmatprep.subr.mxu0 0.0
    %253 = vmatpush1.msra.mxu0 %v127
    %254 = vmatprep.subr.mxu0 0.0
    %255 = vmatpush1.msra.mxu0 %v126
    %256 = vmatprep.subr.mxu0 0.0
    %257 = vmatpush1.msra.mxu0 %v125
    %258 = vmatprep.subr.mxu0 0.0
    %259 = vmatpush2.msra.mxu0 0.0
    %260 = vmatprep.subr.mxu0 0.0
    %261 = vmatpush2.msra.mxu0 0.0
    %262 = vmatprep.subr.mxu0 0.0
    %263 = vmatpush2.msra.mxu0 0.0
    %264 = vmatprep.subr.mxu0 0.0
    %265 = vmatpush2.msra.mxu0 0.0
    %266 = vmatprep.subr.mxu0 0.0
    %267 = vmatpush2.msra.mxu0 0.0
    %268 = vmatprep.subr.mxu0 0.0
    %269 = vmatpush2.msra.mxu0 0.0
    %270 = vmatprep.subr.mxu0 0.0
    %271 = vmatpush2.msra.mxu0 0.0
    %272 = vmatprep.subr.mxu0 0.0
    %273 = vmatpush2.msra.mxu0 0.0
    %274 = vmatprep.subr.mxu0 0.0
    %275 = vmatpush2.msra.mxu0 0.0
    %276 = vmatprep.subr.mxu0 0.0
    %277 = vmatpush2.msra.mxu0 0.0
    %278 = vmatprep.subr.mxu0 0.0
    %279 = vmatpush2.msra.mxu0 0.0
    %280 = vmatprep.subr.mxu0 0.0
    %281 = vmatpush2.msra.mxu0 0.0
    %282 = vmatprep.subr.mxu0 0.0
    %283 = vmatpush2.msra.mxu0 0.0
    %284 = vmatprep.subr.mxu0 0.0
    %285 = vmatpush2.msra.mxu0 0.0
    %286 = vmatprep.subr.mxu0 0.0
    %287 = vmatpush2.msra.mxu0 0.0
    %288 = vmatprep.subr.mxu0 0.0
    %289 = vmatpush2.msra.mxu0 0.0
    %290 = vmatprep.mubr.f32.mxu0 0.0
    %291 = vmatmul.mubr.f32.gmra.mxu0 %v223
    %v292 = vpop.f32.mrf.mxu0
    %v293 = vadd.f32 0.0, %v292
    %v294 = vpop.f32.mrf.mxu0
    %295 = vdwg.mxu0
    %v296 = vsub.f32 0.0, %v143
    %v297 = vadd.f32 %v296, %v144
    %v298 = vmul.f32 %v297, 0.1
    %v299 = vadd.f32 %v143, %v298
    %v300 = vmul.f32 %v144, -0.2
    %v301 = vadd.f32 %v144, %v300
    %vm302 = vcmp.gt.f32.partialorder %v299, 0.3
    %v303 = vsel %vm302, 0.0, %v299
    %v304 = vadd.f32 %v301, %v293
    %v305 = vsub.f32 0.0, %v224
    %v306 = vadd.f32 %v305, %v225
    %v307 = vmul.f32 %v306, 0.1
    %v308 = vadd.f32 %v224, %v307
    %v309 = vmul.f32 %v225, -0.2
    %v310 = vadd.f32 %v225, %v309
    %vm311 = vcmp.gt.f32.partialorder %v308, 0.3
    %v312 = vsel %vm311, 1, 0
    %v313 = vcvt.s32.f32 %v312
    %v314 = vsel %vm311, 0.0, %v308
    %v315 = vadd.f32 %v310, %v212
    %316 = vmatprep.subr.mxu0 0.0
    %317 = vmatpush1.msra.mxu0 %v140
    %318 = vmatprep.subr.mxu0 0.0
    %319 = vmatpush1.msra.mxu0 %v139
    %320 = vmatprep.subr.mxu0 0.0
    %321 = vmatpush1.msra.mxu0 %v138
    %322 = vmatprep.subr.mxu0 0.0
    %323 = vmatpush1.msra.mxu0 %v137
    %324 = vmatprep.subr.mxu0 0.0
    %325 = vmatpush1.msra.mxu0 %v136
    %326 = vmatprep.subr.mxu0 0.0
    %327 = vmatpush1.msra.mxu0 %v135
    %328 = vmatprep.subr.mxu0 0.0
    %329 = vmatpush1.msra.mxu0 %v134
    %330 = vmatprep.subr.mxu0 0.0
    %331 = vmatpush1.msra.mxu0 %v133
    %332 = vmatprep.subr.mxu0 0.0
    %333 = vmatpush1.msra.mxu0 %v132
    %334 = vmatprep.subr.mxu0 0.0
    %335 = vmatpush1.msra.mxu0 %v131
    %336 = vmatprep.subr.mxu0 0.0
    %337 = vmatpush1.msra.mxu0 %v130
    %338 = vmatprep.subr.mxu0 0.0
    %339 = vmatpush1.msra.mxu0 %v129
    %340 = vmatprep.subr.mxu0 0.0
    %341 = vmatpush1.msra.mxu0 %v128
    %342 = vmatprep.subr.mxu0 0.0
    %343 = vmatpush1.msra.mxu0 %v127
    %344 = vmatprep.subr.mxu0 0.0
    %345 = vmatpush1.msra.mxu0 %v126
    %346 = vmatprep.subr.mxu0 0.0
    %347 = vmatpush1.msra.mxu0 %v125
    %348 = vmatprep.subr.mxu0 0.0
    %349 = vmatpush2.msra.mxu0 0.0
    %350 = vmatprep.subr.mxu0 0.0
    %351 = vmatpush2.msra.mxu0 0.0
    %352 = vmatprep.subr.mxu0 0.0
    %353 = vmatpush2.msra.mxu0 0.0
    %354 = vmatprep.subr.mxu0 0.0
    %355 = vmatpush2.msra.mxu0 0.0
    %356 = vmatprep.subr.mxu0 0.0
    %357 = vmatpush2.msra.mxu0 0.0
    %358 = vmatprep.subr.mxu0 0.0
    %359 = vmatpush2.msra.mxu0 0.0
    %360 = vmatprep.subr.mxu0 0.0
    %361 = vmatpush2.msra.mxu0 0.0
    %362 = vmatprep.subr.mxu0 0.0
    %363 = vmatpush2.msra.mxu0 0.0
    %364 = vmatprep.subr.mxu0 0.0
    %365 = vmatpush2.msra.mxu0 0.0
    %366 = vmatprep.subr.mxu0 0.0
    %367 = vmatpush2.msra.mxu0 0.0
    %368 = vmatprep.subr.mxu0 0.0
    %369 = vmatpush2.msra.mxu0 0.0
    %370 = vmatprep.subr.mxu0 0.0
    %371 = vmatpush2.msra.mxu0 0.0
    %372 = vmatprep.subr.mxu0 0.0
    %373 = vmatpush2.msra.mxu0 0.0
    %374 = vmatprep.subr.mxu0 0.0
    %375 = vmatpush2.msra.mxu0 0.0
    %376 = vmatprep.subr.mxu0 0.0
    %377 = vmatpush2.msra.mxu0 0.0
    %378 = vmatprep.subr.mxu0 0.0
    %379 = vmatpush2.msra.mxu0 0.0
    %380 = vmatprep.mubr.f32.mxu0 0.0
    %381 = vmatmul.mubr.f32.gmra.mxu0 %v313
    %v382 = vpop.f32.mrf.mxu0
    %v383 = vadd.f32 0.0, %v382
    %v384 = vpop.f32.mrf.mxu0
    %385 = vdwg.mxu0
    %v386 = vsub.f32 0.0, %v303
    %v387 = vadd.f32 %v386, %v304
    %v388 = vmul.f32 %v387, 0.1
    %v389 = vadd.f32 %v303, %v388
    %v390 = vmul.f32 %v304, -0.2
    %v391 = vadd.f32 %v304, %v390
    %vm392 = vcmp.gt.f32.partialorder %v389, 0.3
    %v393 = vsel %vm392, 0.0, %v389
    %v394 = vadd.f32 %v391, %v383
    %v395 = vsub.f32 0.0, %v314
    %v396 = vadd.f32 %v395, %v315
    %v397 = vmul.f32 %v396, 0.1
    %v398 = vadd.f32 %v314, %v397
    %v399 = vmul.f32 %v315, -0.2
    %v400 = vadd.f32 %v315, %v399
    %vm401 = vcmp.gt.f32.partialorder %v398, 0.3
    %v402 = vsel %vm401, 1, 0
    %v403 = vcvt.s32.f32 %v402
    %v404 = vsel %vm401, 0.0, %v398
    %v405 = vadd.f32 %v400, %v212
    %406 = vmatprep.subr.mxu0 0.0
    %407 = vmatpush1.msra.mxu0 %v140
    %408 = vmatprep.subr.mxu0 0.0
    %409 = vmatpush1.msra.mxu0 %v139
    %410 = vmatprep.subr.mxu0 0.0
    %411 = vmatpush1.msra.mxu0 %v138
    %412 = vmatprep.subr.mxu0 0.0
    %413 = vmatpush1.msra.mxu0 %v137
    %414 = vmatprep.subr.mxu0 0.0
    %415 = vmatpush1.msra.mxu0 %v136
    %416 = vmatprep.subr.mxu0 0.0
    %417 = vmatpush1.msra.mxu0 %v135
    %418 = vmatprep.subr.mxu0 0.0
    %419 = vmatpush1.msra.mxu0 %v134
    %420 = vmatprep.subr.mxu0 0.0
    %421 = vmatpush1.msra.mxu0 %v133
    %422 = vmatprep.subr.mxu0 0.0
    %423 = vmatpush1.msra.mxu0 %v132
    %424 = vmatprep.subr.mxu0 0.0
    %425 = vmatpush1.msra.mxu0 %v131
    %426 = vmatprep.subr.mxu0 0.0
    %427 = vmatpush1.msra.mxu0 %v130
    %428 = vmatprep.subr.mxu0 0.0
    %429 = vmatpush1.msra.mxu0 %v129
    %430 = vmatprep.subr.mxu0 0.0
    %431 = vmatpush1.msra.mxu0 %v128
    %432 = vmatprep.subr.mxu0 0.0
    %433 = vmatpush1.msra.mxu0 %v127
    %434 = vmatprep.subr.mxu0 0.0
    %435 = vmatpush1.msra.mxu0 %v126
    %436 = vmatprep.subr.mxu0 0.0
    %437 = vmatpush1.msra.mxu0 %v125
    %438 = vmatprep.subr.mxu0 0.0
    %439 = vmatpush2.msra.mxu0 0.0
    %440 = vmatprep.subr.mxu0 0.0
    %441 = vmatpush2.msra.mxu0 0.0
    %442 = vmatprep.subr.mxu0 0.0
    %443 = vmatpush2.msra.mxu0 0.0
    %444 = vmatprep.subr.mxu0 0.0
    %445 = vmatpush2.msra.mxu0 0.0
    %446 = vmatprep.subr.mxu0 0.0
    %447 = vmatpush2.msra.mxu0 0.0
    %448 = vmatprep.subr.mxu0 0.0
    %449 = vmatpush2.msra.mxu0 0.0
    %450 = vmatprep.subr.mxu0 0.0
    %451 = vmatpush2.msra.mxu0 0.0
    %452 = vmatprep.subr.mxu0 0.0
    %453 = vmatpush2.msra.mxu0 0.0
    %454 = vmatprep.subr.mxu0 0.0
    %455 = vmatpush2.msra.mxu0 0.0
    %456 = vmatprep.subr.mxu0 0.0
    %457 = vmatpush2.msra.mxu0 0.0
    %458 = vmatprep.subr.mxu0 0.0
    %459 = vmatpush2.msra.mxu0 0.0
    %460 = vmatprep.subr.mxu0 0.0
    %461 = vmatpush2.msra.mxu0 0.0
    %462 = vmatprep.subr.mxu0 0.0
    %463 = vmatpush2.msra.mxu0 0.0
    %464 = vmatprep.subr.mxu0 0.0
    %465 = vmatpush2.msra.mxu0 0.0
    %466 = vmatprep.subr.mxu0 0.0
    %467 = vmatpush2.msra.mxu0 0.0
    %468 = vmatprep.subr.mxu0 0.0
    %469 = vmatpush2.msra.mxu0 0.0
    %470 = vmatprep.mubr.f32.mxu0 0.0
    %471 = vmatmul.mubr.f32.gmra.mxu0 %v403
    %v472 = vpop.f32.mrf.mxu0
    %v473 = vadd.f32 0.0, %v472
    %v474 = vpop.f32.mrf.mxu0
    %475 = vdwg.mxu0
    %v476 = vsub.f32 0.0, %v393
    %v477 = vadd.f32 %v476, %v394
    %v478 = vmul.f32 %v477, 0.1
    %v479 = vadd.f32 %v393, %v478
    %v480 = vmul.f32 %v394, -0.2
    %v481 = vadd.f32 %v394, %v480
    %vm482 = vcmp.gt.f32.partialorder %v479, 0.3
    %v483 = vsel %vm482, 0.0, %v479
    %v484 = vadd.f32 %v481, %v473
    %v485 = vsub.f32 0.0, %v404
    %v486 = vadd.f32 %v485, %v405
    %v487 = vmul.f32 %v486, 0.1
    %v488 = vadd.f32 %v404, %v487
    %v489 = vmul.f32 %v405, -0.2
    %v490 = vadd.f32 %v405, %v489
    %vm491 = vcmp.gt.f32.partialorder %v488, 0.3
    %v492 = vsel %vm491, 1, 0
    %v493 = vcvt.s32.f32 %v492
    %v494 = vsel %vm491, 0.0, %v488
    %v495 = vadd.f32 %v490, %v212
    %496 = vmatprep.subr.mxu0 0.0
    %497 = vmatpush1.msra.mxu0 %v140
    %498 = vmatprep.subr.mxu0 0.0
    %499 = vmatpush1.msra.mxu0 %v139
    %500 = vmatprep.subr.mxu0 0.0
    %501 = vmatpush1.msra.mxu0 %v138
    %502 = vmatprep.subr.mxu0 0.0
    %503 = vmatpush1.msra.mxu0 %v137
    %504 = vmatprep.subr.mxu0 0.0
    %505 = vmatpush1.msra.mxu0 %v136
    %506 = vmatprep.subr.mxu0 0.0
    %507 = vmatpush1.msra.mxu0 %v135
    %508 = vmatprep.subr.mxu0 0.0
    %509 = vmatpush1.msra.mxu0 %v134
    %510 = vmatprep.subr.mxu0 0.0
    %511 = vmatpush1.msra.mxu0 %v133
    %512 = vmatprep.subr.mxu0 0.0
    %513 = vmatpush1.msra.mxu0 %v132
    %514 = vmatprep.subr.mxu0 0.0
    %515 = vmatpush1.msra.mxu0 %v131
    %516 = vmatprep.subr.mxu0 0.0
    %517 = vmatpush1.msra.mxu0 %v130
    %518 = vmatprep.subr.mxu0 0.0
    %519 = vmatpush1.msra.mxu0 %v129
    %520 = vmatprep.subr.mxu0 0.0
    %521 = vmatpush1.msra.mxu0 %v128
    %522 = vmatprep.subr.mxu0 0.0
    %523 = vmatpush1.msra.mxu0 %v127
    %524 = vmatprep.subr.mxu0 0.0
    %525 = vmatpush1.msra.mxu0 %v126
    %526 = vmatprep.subr.mxu0 0.0
    %527 = vmatpush1.msra.mxu0 %v125
    %528 = vmatprep.subr.mxu0 0.0
    %529 = vmatpush2.msra.mxu0 0.0
    %530 = vmatprep.subr.mxu0 0.0
    %531 = vmatpush2.msra.mxu0 0.0
    %532 = vmatprep.subr.mxu0 0.0
    %533 = vmatpush2.msra.mxu0 0.0
    %534 = vmatprep.subr.mxu0 0.0
    %535 = vmatpush2.msra.mxu0 0.0
    %536 = vmatprep.subr.mxu0 0.0
    %537 = vmatpush2.msra.mxu0 0.0
    %538 = vmatprep.subr.mxu0 0.0
    %539 = vmatpush2.msra.mxu0 0.0
    %540 = vmatprep.subr.mxu0 0.0
    %541 = vmatpush2.msra.mxu0 0.0
    %542 = vmatprep.subr.mxu0 0.0
    %543 = vmatpush2.msra.mxu0 0.0
    %544 = vmatprep.subr.mxu0 0.0
    %545 = vmatpush2.msra.mxu0 0.0
    %546 = vmatprep.subr.mxu0 0.0
    %547 = vmatpush2.msra.mxu0 0.0
    %548 = vmatprep.subr.mxu0 0.0
    %549 = vmatpush2.msra.mxu0 0.0
    %550 = vmatprep.subr.mxu0 0.0
    %551 = vmatpush2.msra.mxu0 0.0
    %552 = vmatprep.subr.mxu0 0.0
    %553 = vmatpush2.msra.mxu0 0.0
    %554 = vmatprep.subr.mxu0 0.0
    %555 = vmatpush2.msra.mxu0 0.0
    %556 = vmatprep.subr.mxu0 0.0
    %557 = vmatpush2.msra.mxu0 0.0
    %558 = vmatprep.subr.mxu0 0.0
    %559 = vmatpush2.msra.mxu0 0.0
    %560 = vmatprep.mubr.f32.mxu0 0.0
    %561 = vmatmul.mubr.f32.gmra.mxu0 %v493
    %v562 = vpop.f32.mrf.mxu0
    %v563 = vadd.f32 0.0, %v562
    %v564 = vpop.f32.mrf.mxu0
    %565 = vdwg.mxu0
    %v566 = vsub.f32 0.0, %v483
    %v567 = vadd.f32 %v566, %v484
    %v568 = vmul.f32 %v567, 0.1
    %v569 = vadd.f32 %v483, %v568
    %v570 = vmul.f32 %v484, -0.2
    %v571 = vadd.f32 %v484, %v570
    %vm572 = vcmp.gt.f32.partialorder %v569, 0.3
    %v573 = vsel %vm572, 1, 0
    %v574 = vcvt.s32.f32 %v573
    %v575 = vsel %vm572, 0.0, %v569
    %v576 = vadd.f32 %v571, %v563
    %577 = vst [vmem:[#allocation13] sm:$0xff] %v574
    %578 = vst [vmem:[#allocation14] sm:$0xff] %v494
    %579 = vst [vmem:[#allocation16] sm:$0xff] %v495
    %580 = vst [vmem:[#allocation17] sm:$0xff] %v575
    %581 = vst [vmem:[#allocation19] sm:$0xff] %v576
    // Predicated region
    $region54: #{tpu_custom_call.1} parent=1 // pred_check
      _
    $region55: #{tpu_custom_call.1} parent=1 // pred_check_branch
      %583 = sbr.rel (0) target = $region57
    $region56: #{tpu_custom_call.1} parent=1 // pred_region
      %s585 = ssub.s32 128, 128
      %586 = vsyncadd [#allocation4], %s585
      %s588 = sshll.u32 [#allocation13], 4
      %s589 = int_to_ptr.vmem [resolvable:$true] %s588
      %591 = dma.vmem_to_hbm [thread:$0]  %s589, 128, %s7, [#allocation4]
    $region57: #{tpu_custom_call.1} parent=1 // pred_fallthru
      _
    // Predicated region
    $region58: #{tpu_custom_call.1} parent=1 // pred_check
      _
    $region59: #{tpu_custom_call.1} parent=1 // pred_check_branch
      %593 = sbr.rel (0) target = $region61
    $region60: #{tpu_custom_call.1} parent=1 // pred_region
      %s595 = ssub.s32 128, 128
      %596 = vsyncadd [#allocation15], %s595
      %s598 = sshll.u32 [#allocation14], 4
      %s599 = int_to_ptr.vmem [resolvable:$true] %s598
      %601 = dma.vmem_to_hbm [thread:$0]  %s599, 128, %s8, [#allocation15]
    $region61: #{tpu_custom_call.1} parent=1 // pred_fallthru
      _
    // Predicated region
    $region62: #{tpu_custom_call.1} parent=1 // pred_check
      _
    $region63: #{tpu_custom_call.1} parent=1 // pred_check_branch
      %603 = sbr.rel (0) target = $region65
    $region64: #{tpu_custom_call.1} parent=1 // pred_region
      %s605 = ssub.s32 128, 128
      %606 = vsyncadd [#allocation15], %s605
      %s608 = sshll.u32 [#allocation16], 4
      %s609 = int_to_ptr.vmem [resolvable:$true] %s608
      %611 = dma.vmem_to_hbm [thread:$0]  %s609, 128, %s9, [#allocation15]
    $region65: #{tpu_custom_call.1} parent=1 // pred_fallthru
      _
    // Predicated region
    $region66: #{tpu_custom_call.1} parent=1 // pred_check
      _
    $region67: #{tpu_custom_call.1} parent=1 // pred_check_branch
      %613 = sbr.rel (0) target = $region69
    $region68: #{tpu_custom_call.1} parent=1 // pred_region
      %s615 = ssub.s32 128, 128
      %616 = vsyncadd [#allocation18], %s615
      %s618 = sshll.u32 [#allocation17], 4
      %s619 = int_to_ptr.vmem [resolvable:$true] %s618
      %621 = dma.vmem_to_hbm [thread:$0]  %s619, 128, %s10, [#allocation18]
    $region69: #{tpu_custom_call.1} parent=1 // pred_fallthru
      _
    // Predicated region
    $region70: #{tpu_custom_call.1} parent=1 // pred_check
      _
    $region71: #{tpu_custom_call.1} parent=1 // pred_check_branch
      %623 = sbr.rel (0) target = $region73
    $region72: #{tpu_custom_call.1} parent=1 // pred_region
      %s625 = ssub.s32 128, 128
      %626 = vsyncadd [#allocation18], %s625
      %s628 = sshll.u32 [#allocation19], 4
      %s629 = int_to_ptr.vmem [resolvable:$true] %s628
      %631 = dma.vmem_to_hbm [thread:$0]  %s629, 128, %s11, [#allocation18]
    $region73: #{tpu_custom_call.1} parent=1 // pred_fallthru
      _
    // Predicated region
    $region74: #{tpu_custom_call.1} parent=1 // pred_check
      _
    $region75: #{tpu_custom_call.1} parent=1 // pred_check_branch
      %633 = sbr.rel (0) target = $region77
    $region76: #{tpu_custom_call.1} parent=1 // pred_region
      %634 = dma.done [#allocation4], 128
    $region77: #{tpu_custom_call.1} parent=1 // pred_fallthru
      _
    // Predicated region
    $region78: #{tpu_custom_call.1} parent=1 // pred_check
      _
    $region79: #{tpu_custom_call.1} parent=1 // pred_check_branch
      %636 = sbr.rel (0) target = $region81
    $region80: #{tpu_custom_call.1} parent=1 // pred_region
      %637 = dma.done [#allocation15], 128
    $region81: #{tpu_custom_call.1} parent=1 // pred_fallthru
      _
    // Predicated region
    $region82: #{tpu_custom_call.1} parent=1 // pred_check
      _
    $region83: #{tpu_custom_call.1} parent=1 // pred_check_branch
      %639 = sbr.rel (0) target = $region85
    $region84: #{tpu_custom_call.1} parent=1 // pred_region
      %640 = dma.done [#allocation15], 128
    $region85: #{tpu_custom_call.1} parent=1 // pred_fallthru
      _
    // Predicated region
    $region86: #{tpu_custom_call.1} parent=1 // pred_check
      _
    $region87: #{tpu_custom_call.1} parent=1 // pred_check_branch
      %642 = sbr.rel (0) target = $region89
    $region88: #{tpu_custom_call.1} parent=1 // pred_region
      %643 = dma.done [#allocation18], 128
    $region89: #{tpu_custom_call.1} parent=1 // pred_fallthru
      _
    // Predicated region
    $region90: #{tpu_custom_call.1} parent=1 // pred_check
      _
    $region91: #{tpu_custom_call.1} parent=1 // pred_check_branch
      %645 = sbr.rel (0) target = $region93
    $region92: #{tpu_custom_call.1} parent=1 // pred_region
      %646 = dma.done [#allocation18], 128
    $region93: #{tpu_custom_call.1} parent=1 // pred_fallthru
      _
    %647 = vsyncpa [#allocation3], 1
    %648 = vsyncpa [#allocation6], 1
    %649 = vsyncpa [#allocation9], 1
    %650 = vsyncpa [#allocation12], 1
    %651 = vsyncpa [#allocation4], 1
    %652 = vsyncpa [#allocation15], 1
    %653 = vsyncpa [#allocation18], 1

</llo_original>
